<compile_context>
chip_gen: v5e
topology: v5e:2x2
jax: 0.10.0
libtpu: 0.0.40
codegen_flags: <defaults>
</compile_context>

<pallas_src>
import jax
import jax.numpy as jnp
from jax.experimental import pallas as pl
from jax.experimental.pallas import tpu as pltpu


def _policy_kernel(x_ref, w1_ref, b1_ref, w2_ref, b2_ref, probs_ref):
    # fc1 + ReLU
    x = x_ref[...]
    h = jnp.dot(x, w1_ref[...], preferred_element_type=jnp.float32) + b1_ref[...]
    h = jnp.maximum(h, 0.0)

    # fc2 logits
    logits = jnp.dot(h, w2_ref[...], preferred_element_type=jnp.float32) + b2_ref[...]

    # numerically-stable softmax over the action dimension (dim=1)
    m = jnp.max(logits, axis=-1, keepdims=True)
    e = jnp.exp(logits - m)
    s = jnp.sum(e, axis=-1, keepdims=True)
    probs_ref[...] = (e / s).astype(probs_ref.dtype)


def policy_net(states, w1, b1, w2, b2, *, tile_b=8):
    """states: (B, state_dim) f32. Weights stored (in, out); biases (1, out)."""
    B, S = states.shape
    H = w1.shape[1]
    A = w2.shape[1]

    # Tile the batch; pad to a multiple of tile_b so the grid covers it exactly.
    n_tiles = pl.cdiv(B, tile_b)
    Bp = n_tiles * tile_b
    if Bp != B:
        states = jnp.pad(states, ((0, Bp - B), (0, 0)))

    grid_spec = pltpu.PrefetchScalarGridSpec(
        num_scalar_prefetch=0,
        grid=(n_tiles,),
        in_specs=[
            # streamed activations: one (tile_b, S) slab per grid step
            pl.BlockSpec((tile_b, S), lambda i: (i, 0)),
            # weights / biases: constant block index -> VMEM-resident, fetched once
            pl.BlockSpec((S, H), lambda i: (0, 0)),
            pl.BlockSpec((1, H), lambda i: (0, 0)),
            pl.BlockSpec((H, A), lambda i: (0, 0)),
            pl.BlockSpec((1, A), lambda i: (0, 0)),
        ],
        out_specs=pl.BlockSpec((tile_b, A), lambda i: (i, 0)),
    )

    probs = pl.pallas_call(
        _policy_kernel,
        out_shape=jax.ShapeDtypeStruct((Bp, A), jnp.float32),
        grid_spec=grid_spec,
        compiler_params=pltpu.CompilerParams(
            # batch tiles are independent -> shard across TCs on v7x
            dimension_semantics=("parallel",),
        ),
    )(states, w1, b1, w2, b2)
    return probs[:B]


def init_params(key, state_dim, hidden_dim, action_dim):
    """Deterministic init mirroring nn.Linear default (uniform ±1/sqrt(fan_in))."""
    ks = jax.random.split(key, 4)

    def linear(kw, kb, fan_in, fan_out):
        bound = 1.0 / jnp.sqrt(fan_in)
        # stored pre-transposed: (in, out)
        w = jax.random.uniform(kw, (fan_in, fan_out), jnp.float32, -bound, bound)
        b = jax.random.uniform(kb, (1, fan_out), jnp.float32, -bound, bound)
        return w, b

    w1, b1 = linear(ks[0], ks[1], state_dim, hidden_dim)
    w2, b2 = linear(ks[2], ks[3], hidden_dim, action_dim)
    return w1, b1, w2, b2


if __name__ == "__main__":
    state_dim, hidden_dim, action_dim = 8, 32, 4
    batch = 16          # two grid steps with tile_b=8 to exercise the pipeline
    tile_b = 8

    key = jax.random.PRNGKey(0)
    k_x, k_p = jax.random.split(key)
    states = jax.random.normal(k_x, (batch, state_dim), jnp.float32)
    w1, b1, w2, b2 = init_params(k_p, state_dim, hidden_dim, action_dim)

    probs = policy_net(states, w1, b1, w2, b2, tile_b=tile_b)
    jax.block_until_ready(probs)

    # reference check in plain JAX
    h = jnp.maximum(states @ w1 + b1, 0.0)
    probs_ref = jax.nn.softmax(h @ w2 + b2, axis=1)
    assert probs.shape == (batch, action_dim)
    assert jnp.allclose(probs, probs_ref, atol=1e-5), "probs mismatch"
    assert jnp.allclose(jnp.sum(probs, axis=1), 1.0, atol=1e-5), "rows must sum to 1"

    print("KERNEL_OK")
</pallas_src>

<mosaic_0001>
module attributes {stable_mosaic.version = 11 : i64} {
  func.func @_policy_kernel(%arg0: i32, %arg1: memref<8x8xf32, #tpu.memory_space<vmem>>, %arg2: memref<8x32xf32, #tpu.memory_space<vmem>>, %arg3: memref<1x32xf32, #tpu.memory_space<vmem>>, %arg4: memref<32x4xf32, #tpu.memory_space<vmem>>, %arg5: memref<1x4xf32, #tpu.memory_space<vmem>>, %arg6: memref<8x4xf32, #tpu.memory_space<vmem>>) attributes {dimension_semantics = [#tpu.dimension_semantics<parallel>], iteration_bounds = array<i64: 2>, scalar_prefetch = 0 : i64, scratch_operands = 0 : i64, tpu.core_type = #tpu.core_type<tc>, window_params = [{transform_indices = @transform_0, window_bounds = array<i64: 8, 8>}, {pipeline_mode = #tpu.pipeline_mode<synchronous>, transform_indices = @transform_1, window_bounds = array<i64: 8, 32>}, {pipeline_mode = #tpu.pipeline_mode<synchronous>, transform_indices = @transform_2, window_bounds = array<i64: 1, 32>}, {pipeline_mode = #tpu.pipeline_mode<synchronous>, transform_indices = @transform_3, window_bounds = array<i64: 32, 4>}, {pipeline_mode = #tpu.pipeline_mode<synchronous>, transform_indices = @transform_4, window_bounds = array<i64: 1, 4>}, {transform_indices = @transform_5, window_bounds = array<i64: 8, 4>}]} {
    %c0 = arith.constant 0 : index
    %c0_0 = arith.constant 0 : index
    %0 = vector.load %arg1[%c0, %c0_0] : memref<8x8xf32, #tpu.memory_space<vmem>>, vector<8x8xf32>
    %c0_1 = arith.constant 0 : index
    %c0_2 = arith.constant 0 : index
    %1 = vector.load %arg2[%c0_1, %c0_2] : memref<8x32xf32, #tpu.memory_space<vmem>>, vector<8x32xf32>
    %cst = arith.constant dense<0.000000e+00> : vector<8x32xf32>
    %2 = tpu.matmul %0, %1, %cst {dimension_numbers = #tpu.dot_dimension_numbers<[1], [0], [0], [1], [0, 0, 1, 1], [], []>} : vector<8x8xf32>, vector<8x32xf32>, vector<8x32xf32> -> vector<8x32xf32>
    %c0_3 = arith.constant 0 : index
    %c0_4 = arith.constant 0 : index
    %3 = vector.load %arg3[%c0_3, %c0_4] : memref<1x32xf32, #tpu.memory_space<vmem>>, vector<1x32xf32>
    %4 = vector.broadcast %3 : vector<1x32xf32> to vector<8x32xf32>
    %5 = arith.addf %2, %4 : vector<8x32xf32>
    %cst_5 = arith.constant 0.000000e+00 : f32
    %6 = vector.broadcast %cst_5 : f32 to vector<8x32xf32>
    %7 = arith.maximumf %5, %6 : vector<8x32xf32>
    %c0_6 = arith.constant 0 : index
    %c0_7 = arith.constant 0 : index
    %8 = vector.load %arg4[%c0_6, %c0_7] : memref<32x4xf32, #tpu.memory_space<vmem>>, vector<32x4xf32>
    %cst_8 = arith.constant dense<0.000000e+00> : vector<8x4xf32>
    %9 = tpu.matmul %7, %8, %cst_8 {dimension_numbers = #tpu.dot_dimension_numbers<[1], [0], [0], [1], [0, 0, 1, 1], [], []>} : vector<8x32xf32>, vector<32x4xf32>, vector<8x4xf32> -> vector<8x4xf32>
    %c0_9 = arith.constant 0 : index
    %c0_10 = arith.constant 0 : index
    %10 = vector.load %arg5[%c0_9, %c0_10] : memref<1x4xf32, #tpu.memory_space<vmem>>, vector<1x4xf32>
    %11 = vector.broadcast %10 : vector<1x4xf32> to vector<8x4xf32>
    %12 = arith.addf %9, %11 : vector<8x4xf32>
    %cst_11 = arith.constant dense<0xFF800000> : vector<8xf32>
    %13 = vector.multi_reduction <maximumf>, %12, %cst_11 [1] : vector<8x4xf32> to vector<8xf32>
    %14 = vector.shape_cast %13 : vector<8xf32> to vector<8x1xf32>
    %15 = vector.broadcast %14 : vector<8x1xf32> to vector<8x4xf32>
    %16 = arith.subf %12, %15 : vector<8x4xf32>
    %17 = math.exp %16 : vector<8x4xf32>
    %cst_12 = arith.constant dense<0.000000e+00> : vector<8xf32>
    %18 = vector.multi_reduction <add>, %17, %cst_12 [1] : vector<8x4xf32> to vector<8xf32>
    %19 = vector.shape_cast %18 : vector<8xf32> to vector<8x1xf32>
    %20 = vector.broadcast %19 : vector<8x1xf32> to vector<8x4xf32>
    %21 = arith.divf %17, %20 : vector<8x4xf32>
    %c0_13 = arith.constant 0 : index
    %c0_14 = arith.constant 0 : index
    %22 = vector.load %arg6[%c0_13, %c0_14] : memref<8x4xf32, #tpu.memory_space<vmem>>, vector<8x4xf32>
    tpu.vector_store %arg6[%c0_13, %c0_14], %21 {strides = array<i32>} : memref<8x4xf32, #tpu.memory_space<vmem>>, vector<8x4xf32>,
    return
  }
  func.func @transform_0(%arg0: i32) -> (i32, i32) {
    %c0_i32 = arith.constant 0 : i32
    %c0_i32_0 = arith.constant 0 : i32
    return %arg0, %c0_i32 : i32, i32
  }
  func.func @transform_1(%arg0: i32) -> (i32, i32) {
    %c0_i32 = arith.constant 0 : i32
    %c0_i32_0 = arith.constant 0 : i32
    %c0_i32_1 = arith.constant 0 : i32
    return %c0_i32, %c0_i32_0 : i32, i32
  }
  func.func @transform_2(%arg0: i32) -> (i32, i32) {
    %c0_i32 = arith.constant 0 : i32
    %c0_i32_0 = arith.constant 0 : i32
    %c0_i32_1 = arith.constant 0 : i32
    return %c0_i32, %c0_i32_0 : i32, i32
  }
  func.func @transform_3(%arg0: i32) -> (i32, i32) {
    %c0_i32 = arith.constant 0 : i32
    %c0_i32_0 = arith.constant 0 : i32
    %c0_i32_1 = arith.constant 0 : i32
    return %c0_i32, %c0_i32_0 : i32, i32
  }
  func.func @transform_4(%arg0: i32) -> (i32, i32) {
    %c0_i32 = arith.constant 0 : i32
    %c0_i32_0 = arith.constant 0 : i32
    %c0_i32_1 = arith.constant 0 : i32
    return %c0_i32, %c0_i32_0 : i32, i32
  }
  func.func @transform_5(%arg0: i32) -> (i32, i32) {
    %c0_i32 = arith.constant 0 : i32
    %c0_i32_0 = arith.constant 0 : i32
    return %arg0, %c0_i32 : i32, i32
  }
}

</mosaic_0001>

<llo_original>
// kernel: tpu_custom_call.1
$region0: #{tpu_custom_call.1}
  #allocation0 [shape = 'u32[]', space=smem, size = 0x4, offset = 0x4, fixed_abs, tag = 'smem constant byte address 0x4 - core index']
  #allocation1 [shape = 'u32[72,128]{1,0:T(1,128)}', space=vmem, size = 0x9000, scoped, tag = 'internal scratch']
  %s0 = inlined_call_operand.vmem [shape: f32[16,8], index: 0, kind: input, shape index: {}]
  %s1 = inlined_call_operand.vmem [shape: f32[8,32], index: 1, kind: input, shape index: {}]
  %s2 = inlined_call_operand.vmem [shape: f32[1,32], index: 2, kind: input, shape index: {}]
  %s3 = inlined_call_operand.vmem [shape: f32[32,4], index: 3, kind: input, shape index: {}]
  %s4 = inlined_call_operand.vmem [shape: f32[1,4], index: 4, kind: input, shape index: {}]
  %s5 = inlined_call_operand.vmem [shape: f32[16,4], index: 5, kind: output, shape index: {}]
  %s6 = sld [smem:[#allocation0]]
  $region53: #{tpu_custom_call.1} parent=0
    _
  %s8 = ssub.s32 1, %s6
  %s9 = scalar_select 0, %s8, %s6
  loop: start=0, step=1, limit=4
  $region2: #{tpu_custom_call.1} parent=0 // loop_pre_header
    _
  $region3: #{tpu_custom_call.1} parent=0 // loop_header
    %s11 = sphi 0, %s15
    %p12 = scmp.ge.s32.totalorder %s11, 4
    %s21 = sphi 0, %s23
    %s24 = sphi 0, %s21
    %s25 = sphi 0, %s24
    %s41 = sphi 0, %s25
    %s45 = sphi 0, %s45
    %s47 = sphi 0, %s45
    %s48 = sphi 0, %s47
    %s62 = sphi 0, %s48
    %s66 = sphi 0, %s66
    %s68 = sphi 0, %s66
    %s69 = sphi 0, %s68
    %s83 = sphi 0, %s69
    %s87 = sphi 0, %s87
    %s89 = sphi 0, %s87
    %s90 = sphi 0, %s89
    %s104 = sphi 0, %s90
    %s108 = sphi 0, %s108
    %s110 = sphi 0, %s108
    %s111 = sphi 0, %s110
    %s125 = sphi 0, %s111
    %s131 = sphi 0, %s133
    %s134 = sphi 0, %s131
    %s135 = sphi 0, %s134
    %s151 = sphi 0, %s135
  $region4: #{tpu_custom_call.1} parent=0 // loop_header_branch
    %14 = sbr.rel (%p12) target = $region8
  $region5: #{tpu_custom_call.1} parent=0 // loop_body
    %s16 = ssub.s32 %s11, 1
    %s17 = ssub.s32 %s11, 2
    %s18 = sadd.s32 %s11, 1
    %s19 = ssub.s32 %s11, %s18
    %p20 = scmp.eq.s32.totalorder %s19, 0
    %s22 = sadd.s32 %s21, 1
    %s23 = scalar_select %p20, %s21, %s22
    %p26 = pneg %p20
    %p27 = scmp.eq.s32.totalorder %s11, 1
    %p28 = por %p26, %p27
    %p29 = scmp.ne.s32.totalorder %s21, %s24
    %p30 = scmp.eq.s32.totalorder %s11, 0
    %p31 = por %p29, %p30
    %p32 = scmp.ne.s32.totalorder %s21, %s24
    %p33 = scmp.eq.s32.totalorder %s16, 1
    %p34 = por %p32, %p33
    %p35 = scmp.ne.s32.totalorder %s24, %s25
    %p36 = scmp.eq.s32.totalorder %s16, 0
    %p37 = por %p35, %p36
    %p38 = scmp.ne.s32.totalorder %s24, %s25
    %p39 = scmp.eq.s32.totalorder %s17, 1
    %p40 = por %p38, %p39
    %p42 = scmp.ne.s32.totalorder %s25, %s41
    %p43 = scmp.eq.s32.totalorder %s17, 0
    %p44 = por %p42, %p43
    %s46 = sadd.s32 %s45, 1
    %p49 = scmp.eq.s32.totalorder %s11, 1
    %p50 = scmp.ne.s32.totalorder %s45, %s47
    %p51 = scmp.eq.s32.totalorder %s11, 0
    %p52 = por %p50, %p51
    %p53 = scmp.ne.s32.totalorder %s45, %s47
    %p54 = scmp.eq.s32.totalorder %s16, 1
    %p55 = por %p53, %p54
    %p56 = scmp.ne.s32.totalorder %s47, %s48
    %p57 = scmp.eq.s32.totalorder %s16, 0
    %p58 = por %p56, %p57
    %p59 = scmp.ne.s32.totalorder %s47, %s48
    %p60 = scmp.eq.s32.totalorder %s17, 1
    %p61 = por %p59, %p60
    %p63 = scmp.ne.s32.totalorder %s48, %s62
    %p64 = scmp.eq.s32.totalorder %s17, 0
    %p65 = por %p63, %p64
    %s67 = sadd.s32 %s66, 1
    %p70 = scmp.eq.s32.totalorder %s11, 1
    %p71 = scmp.ne.s32.totalorder %s66, %s68
    %p72 = scmp.eq.s32.totalorder %s11, 0
    %p73 = por %p71, %p72
    %p74 = scmp.ne.s32.totalorder %s66, %s68
    %p75 = scmp.eq.s32.totalorder %s16, 1
    %p76 = por %p74, %p75
    %p77 = scmp.ne.s32.totalorder %s68, %s69
    %p78 = scmp.eq.s32.totalorder %s16, 0
    %p79 = por %p77, %p78
    %p80 = scmp.ne.s32.totalorder %s68, %s69
    %p81 = scmp.eq.s32.totalorder %s17, 1
    %p82 = por %p80, %p81
    %p84 = scmp.ne.s32.totalorder %s69, %s83
    %p85 = scmp.eq.s32.totalorder %s17, 0
    %p86 = por %p84, %p85
    %s88 = sadd.s32 %s87, 1
    %p91 = scmp.eq.s32.totalorder %s11, 1
    %p92 = scmp.ne.s32.totalorder %s87, %s89
    %p93 = scmp.eq.s32.totalorder %s11, 0
    %p94 = por %p92, %p93
    %p95 = scmp.ne.s32.totalorder %s87, %s89
    %p96 = scmp.eq.s32.totalorder %s16, 1
    %p97 = por %p95, %p96
    %p98 = scmp.ne.s32.totalorder %s89, %s90
    %p99 = scmp.eq.s32.totalorder %s16, 0
    %p100 = por %p98, %p99
    %p101 = scmp.ne.s32.totalorder %s89, %s90
    %p102 = scmp.eq.s32.totalorder %s17, 1
    %p103 = por %p101, %p102
    %p105 = scmp.ne.s32.totalorder %s90, %s104
    %p106 = scmp.eq.s32.totalorder %s17, 0
    %p107 = por %p105, %p106
    %s109 = sadd.s32 %s108, 1
    %p112 = scmp.eq.s32.totalorder %s11, 1
    %p113 = scmp.ne.s32.totalorder %s108, %s110
    %p114 = scmp.eq.s32.totalorder %s11, 0
    %p115 = por %p113, %p114
    %p116 = scmp.ne.s32.totalorder %s108, %s110
    %p117 = scmp.eq.s32.totalorder %s16, 1
    %p118 = por %p116, %p117
    %p119 = scmp.ne.s32.totalorder %s110, %s111
    %p120 = scmp.eq.s32.totalorder %s16, 0
    %p121 = por %p119, %p120
    %p122 = scmp.ne.s32.totalorder %s110, %s111
    %p123 = scmp.eq.s32.totalorder %s17, 1
    %p124 = por %p122, %p123
    %p126 = scmp.ne.s32.totalorder %s111, %s125
    %p127 = scmp.eq.s32.totalorder %s17, 0
    %p128 = por %p126, %p127
    %s129 = ssub.s32 %s11, %s18
    %p130 = scmp.eq.s32.totalorder %s129, 0
    %s132 = sadd.s32 %s131, 1
    %s133 = scalar_select %p130, %s131, %s132
    %p136 = pneg %p130
    %p137 = scmp.eq.s32.totalorder %s11, 1
    %p138 = por %p136, %p137
    %p139 = scmp.ne.s32.totalorder %s131, %s134
    %p140 = scmp.eq.s32.totalorder %s11, 0
    %p141 = por %p139, %p140
    %p142 = scmp.ne.s32.totalorder %s131, %s134
    %p143 = scmp.eq.s32.totalorder %s16, 1
    %p144 = por %p142, %p143
    %p145 = scmp.ne.s32.totalorder %s134, %s135
    %p146 = scmp.eq.s32.totalorder %s16, 0
    %p147 = por %p145, %p146
    %p148 = scmp.ne.s32.totalorder %s134, %s135
    %p149 = scmp.eq.s32.totalorder %s17, 1
    %p150 = por %p148, %p149
    %p152 = scmp.ne.s32.totalorder %s135, %s151
    %p153 = scmp.eq.s32.totalorder %s17, 0
    %p154 = por %p152, %p153
    %p155 = scmp.le.s32.totalorder 1, %s11
    %p156 = scmp.lt.s32.totalorder %s11, 3
    %p157 = pnand %p155, %p156
    %p158 = pneg %p157
    // Predicated region
    $region9: #{tpu_custom_call.1} parent=5 // pred_check
      _
    $region10: #{tpu_custom_call.1} parent=5 // pred_check_branch
      %160 = sbr.rel (%p157) target = $region12
    $region11: #{tpu_custom_call.1} parent=5 // pred_region
      %s161 = ssub.s32 %s11, 1
      // Predicated region
      $region13: #{tpu_custom_call.1} parent=11 // pred_check
        %p162 = pneg %p58
      $region14: #{tpu_custom_call.1} parent=11 // pred_check_branch
        %164 = sbr.rel (%p162) target = $region16
      $region15: #{tpu_custom_call.1} parent=11 // pred_region
        _
      $region16: #{tpu_custom_call.1} parent=11 // pred_fallthru
        _
      // Predicated region
      $region17: #{tpu_custom_call.1} parent=11 // pred_check
        %p165 = pneg %p79
      $region18: #{tpu_custom_call.1} parent=11 // pred_check_branch
        %167 = sbr.rel (%p165) target = $region20
      $region19: #{tpu_custom_call.1} parent=11 // pred_region
        _
      $region20: #{tpu_custom_call.1} parent=11 // pred_fallthru
        _
      // Predicated region
      $region21: #{tpu_custom_call.1} parent=11 // pred_check
        %p168 = pneg %p100
      $region22: #{tpu_custom_call.1} parent=11 // pred_check_branch
        %170 = sbr.rel (%p168) target = $region24
      $region23: #{tpu_custom_call.1} parent=11 // pred_region
        _
      $region24: #{tpu_custom_call.1} parent=11 // pred_fallthru
        _
      // Predicated region
      $region25: #{tpu_custom_call.1} parent=11 // pred_check
        %p171 = pneg %p121
      $region26: #{tpu_custom_call.1} parent=11 // pred_check_branch
        %173 = sbr.rel (%p171) target = $region28
      $region27: #{tpu_custom_call.1} parent=11 // pred_region
        _
      $region28: #{tpu_custom_call.1} parent=11 // pred_fallthru
        _
    $region12: #{tpu_custom_call.1} parent=5 // pred_fallthru
      _
    %p174 = scmp.lt.s32.totalorder %s11, 2
    // Predicated region
    $region29: #{tpu_custom_call.1} parent=5 // pred_check
      %p175 = pneg %p174
    $region30: #{tpu_custom_call.1} parent=5 // pred_check_branch
      %177 = sbr.rel (%p175) target = $region32
    $region31: #{tpu_custom_call.1} parent=5 // pred_region
      // Predicated region
      $region33: #{tpu_custom_call.1} parent=31 // pred_check
        %p178 = pneg %p31
      $region34: #{tpu_custom_call.1} parent=31 // pred_check_branch
        %180 = sbr.rel (%p178) target = $region36
      $region35: #{tpu_custom_call.1} parent=31 // pred_region
        %p181 = scmp.lt.s32.totalorder %s11, 1
        %s182 = scalar_select %p181, %s11, 1
        %s183 = smul.addr %s182, 8
        %s184 = scalar_lea.vmem %s0, %s183
      $region36: #{tpu_custom_call.1} parent=31 // pred_fallthru
        _
    $region32: #{tpu_custom_call.1} parent=5 // pred_fallthru
      _
    %p185 = scmp.le.s32.totalorder 1, %s11
    %p186 = scmp.lt.s32.totalorder %s11, 3
    %p187 = pnand %p185, %p186
    %p188 = pneg %p187
    // Predicated region
    $region37: #{tpu_custom_call.1} parent=5 // pred_check
      _
    $region38: #{tpu_custom_call.1} parent=5 // pred_check_branch
      %190 = sbr.rel (%p187) target = $region40
    $region39: #{tpu_custom_call.1} parent=5 // pred_region
      %s191 = ssub.s32 %s11, 1
      %p192 = scmp.lt.s32.totalorder %s16, 1
      %s193 = scalar_select %p192, %s16, 1
      %s194 = smul.addr %s193, 8
      %s195 = scalar_lea.vmem %s0, %s194
      %p196 = pneg %p37
      %p197 = pneg %p34
      %p198 = pneg %p58
      %p199 = pneg %p55
      %p200 = pneg %p79
      %p201 = pneg %p76
      %p202 = pneg %p100
      %p203 = pneg %p97
      %p204 = pneg %p121
      %p205 = pneg %p118
      %p206 = pneg %p147
      %p207 = pneg %p144
      %p208 = scmp.lt.s32.totalorder %s16, 1
      %s209 = scalar_select %p208, %s16, 1
      %s210 = smul.addr %s209, 8
      %s211 = scalar_lea.vmem %s5, %s210
      %p212 = scmp.lt.s32.totalorder %s16, 1
      %s213 = scalar_select %p212, %s16, 1
      %s214 = smul.addr %s213, 8
      %s215 = scalar_lea.vmem %s0, %s214
      %p216 = scmp.lt.s32.totalorder %s16, 1
      %s217 = scalar_select %p216, %s16, 1
      %s218 = smul.addr %s217, 8
      %s219 = scalar_lea.vmem %s5, %s218
      %v220 = vld [vmem:[%s215] sm:$0xff]
      %v221 = vld [vmem:[%s1] sm:$0xff]
      %v222 = vld [vmem:[%s2] sm:$0x1]
      %v224 = vperm.slane %v222, 0
      %vm226 = vcmask 64512
      %v228 = vsel %vm226, %v220, 0
      %230 = vmatpush.msra.mxu0 0.0
      %231 = vmatpush.msra.mxu0 0.0
      %232 = vmatpush.msra.mxu0 0.0
      %233 = vmatpush.msra.mxu0 0.0
      %234 = vmatpush.msra.mxu0 0.0
      %235 = vmatpush.msra.mxu0 0.0
      %236 = vmatpush.msra.mxu0 0.0
      %237 = vmatpush.msra.mxu0 0.0
      %238 = vmatpush.msra.mxu0 0.0
      %239 = vmatpush.msra.mxu0 0.0
      %240 = vmatpush.msra.mxu0 0.0
      %241 = vmatpush.msra.mxu0 0.0
      %242 = vmatpush.msra.mxu0 0.0
      %243 = vmatpush.msra.mxu0 0.0
      %244 = vmatpush.msra.mxu0 0.0
      %245 = vmatpush.msra.mxu0 %v221
      %246 = vmatmul.f32.gmra.mxu0 %v228
      %v247 = vpop.f32.mrf.mxu0
      %v248 = vadd.f32 %v224, %v247
      %249 = vdwg.mxu0
      %v250 = vmax.f32 %v248, 0.0
      %v251 = vld [vmem:[%s3] sm:$0xff]
      %v252 = vld [vmem:[%s3 + $0x8] sm:$0xff]
      %v253 = vld [vmem:[%s3 + $0x10] sm:$0xff]
      %v254 = vld [vmem:[%s3 + $0x18] sm:$0xff]
      %v255 = vld [vmem:[%s4] sm:$0x1]
      %v257 = vperm.slane %v255, 0
      %vm259 = vcmask 261120
      %v261 = vsel %vm259, %v250, 0
      %263 = vmatpush.msra.mxu0 0.0
      %264 = vmatpush.msra.mxu0 0.0
      %265 = vmatpush.msra.mxu0 0.0
      %266 = vmatpush.msra.mxu0 0.0
      %267 = vmatpush.msra.mxu0 0.0
      %268 = vmatpush.msra.mxu0 0.0
      %269 = vmatpush.msra.mxu0 0.0
      %270 = vmatpush.msra.mxu0 0.0
      %271 = vmatpush.msra.mxu0 0.0
      %272 = vmatpush.msra.mxu0 0.0
      %273 = vmatpush.msra.mxu0 0.0
      %274 = vmatpush.msra.mxu0 0.0
      %275 = vmatpush.msra.mxu0 %v254
      %276 = vmatpush.msra.mxu0 %v253
      %277 = vmatpush.msra.mxu0 %v252
      %278 = vmatpush.msra.mxu0 %v251
      %279 = vmatmul.f32.gmra.mxu0 %v261
      %v280 = vpop.f32.mrf.mxu0
      %v281 = vadd.f32 %v257, %v280
      %282 = vdwg.mxu0
      %vm283 = vcmask 31744
      %v284 = vsel %vm283, %v281, -inf
      %285 = vmax.xlane.f32.xlu0 %v284
      %v286 = vpop.xlane.xlu0 %285
      %v287 = vsub.f32 %v281, %v286
      %v288 = vmul.f32 %v287, 1.442695
      %v289 = vpow.pop %v288
      %v290 = vsel %vm283, %v289, 0.0
      %291 = vadd.xlane.f32.xlu0 %v290
      %v292 = vpop.xlane.xlu0 %291
      %v293 = vrcp.pop %v292
      %v294 = vmul.f32 %v292, %v293
      %v295 = vsub.f32 1.0, %v294
      %v296 = vmul.f32 %v293, %v295
      %v297 = vadd.f32 %v293, %v296
      %vm298 = vweird.f32 %v292
      %vm299 = vweird.f32 %v293
      %vm300 = vmor %vm298, %vm299
      %v301 = vsel %vm300, %v293, %v297
      %v302 = vand.u32 2147483647, %v292
      %vm303 = vcmp.eq.f32.partialorder %v302, 8.507059e+37
      %v304 = vand.u32 %v292, 2147483648
      %v305 = vor.u32 1.1754944e-38, %v304
      %v306 = vsel %vm303, %v305, %v301
      %v307 = vmul.f32 %v289, %v306
      %308 = vst.msk [vmem:[%s219] sm:$0xff] %vm283, %v307
      %p309 = scmp.lt.s32.totalorder %s16, 1
      %s310 = scalar_select %p309, %s16, 1
      %s311 = smul.addr %s310, 8
      %s312 = scalar_lea.vmem %s5, %s311
      // Predicated region
      $region41: #{tpu_custom_call.1} parent=39 // pred_check
        %p313 = pneg %p144
      $region42: #{tpu_custom_call.1} parent=39 // pred_check_branch
        %315 = sbr.rel (%p313) target = $region44
      $region43: #{tpu_custom_call.1} parent=39 // pred_region
        _
      $region44: #{tpu_custom_call.1} parent=39 // pred_fallthru
        _
    $region40: #{tpu_custom_call.1} parent=5 // pred_fallthru
      _
    %p316 = scmp.le.s32.totalorder 2, %s11
    // Predicated region
    $region45: #{tpu_custom_call.1} parent=5 // pred_check
      %p317 = pneg %p316
    $region46: #{tpu_custom_call.1} parent=5 // pred_check_branch
      %319 = sbr.rel (%p317) target = $region48
    $region47: #{tpu_custom_call.1} parent=5 // pred_region
      %s320 = ssub.s32 %s11, 2
      // Predicated region
      $region49: #{tpu_custom_call.1} parent=47 // pred_check
        %p321 = pneg %p150
      $region50: #{tpu_custom_call.1} parent=47 // pred_check_branch
        %323 = sbr.rel (%p321) target = $region52
      $region51: #{tpu_custom_call.1} parent=47 // pred_region
        %p324 = scmp.lt.s32.totalorder %s17, 1
        %s325 = scalar_select %p324, %s17, 1
        %s326 = smul.addr %s325, 8
        %s327 = scalar_lea.vmem %s5, %s326
      $region52: #{tpu_custom_call.1} parent=47 // pred_fallthru
        _
    $region48: #{tpu_custom_call.1} parent=5 // pred_fallthru
      _
  $region6: #{tpu_custom_call.1} parent=0 // loop_footer
    %s15 = sadd.s32 1, %s11
  $region7: #{tpu_custom_call.1} parent=0 // loop_footer_branch
    %10 = sbr.rel target = $region3
  $region8: #{tpu_custom_call.1} parent=0 // loop_exit
    _

</llo_original>
